<compile_context>
chip_gen: v5e
topology: v5e:2x2
jax: 0.10.0
libtpu: 0.0.40
codegen_flags: <defaults>
</compile_context>

<pallas_src>
import functools

import jax
import jax.numpy as jnp
from jax.experimental import pallas as pl
from jax.experimental.pallas import tpu as pltpu


def _round_up(x, m):
    return ((x + m - 1) // m) * m


def _largest_divisor_leq(n, cap):
    cap = max(1, min(n, cap))
    for d in range(cap, 0, -1):
        if n % d == 0:
            return d
    return 1


def _vmem_capacity_bytes():
    # Generation-aware sizing (v5e/v6e: 128 MiB, v7x: 64 MiB per TensorCore).
    try:
        return int(pltpu.get_tpu_info().vmem_capacity_bytes)
    except Exception:
        return 64 * 1024 * 1024  # conservative fallback (v7x per-TC capacity)


def _choose_tl(L, c_pad, itemsize, budget_bytes, max_tl):
    """Largest multiple-of-8 divisor of L whose halo window slab fits the budget."""
    max_tl = L if max_tl is None else max_tl
    cap = max(8, min(L, max_tl))
    best = None
    for tl in range(8, cap + 1, 8):
        if L % tl == 0 and (tl + 8) * c_pad * itemsize <= budget_bytes:
            best = tl
    # TODO(synk): L with no multiple-of-8 divisor under budget falls back to a single
    # whole-L tile (ragged last-tile masking not implemented); huge awkward L may
    # exceed the VMEM limit in that path.
    return best if best is not None else L


def _make_kernel(nb, tl, w_rows, cp, compute_dtype):
    m = nb * w_rows  # matmul M rows per grid step (batch fold rides in M)

    def kernel(xw_ref, w1_ref, w2_ref, b1_ref, b2_ref, o_ref):
        j = pl.program_id(1)
        last = pl.num_programs(1) - 1

        # One contiguous, wrapper-grouped halo-extended window per grid step.
        x2 = xw_ref[0, 0]                                                   # (m, C)

        # ---- conv1: ONE matmul against the lane-concatenated taps (C, 3C), then
        # shifted-OUTPUT accumulation (no shifted LHS copies, no concatenates).
        # The tap slices are 128-aligned lane views; the +1/+2 row shifts are the
        # only sublane-misaligned reads left per conv.
        p = jnp.dot(x2, w1_ref[...], preferred_element_type=jnp.float32)    # (m, 3C)
        h = p[0:m - 2, 0:cp] + p[1:m - 1, cp:2 * cp] + p[2:m, 2 * cp:3 * cp]
        h = jnp.maximum(h + b1_ref[...], 0.0)                               # (m-2, C)

        # conv2's pad=1 zero-padding applies to conv1's *output*: window rows that
        # map to sequence positions -1 and L are zeroed.  Interior tiles only pay a
        # single (m,1)-predicate select (the scalar grid conditions fold it away).
        t_idx = jax.lax.broadcasted_iota(jnp.int32, (m - 2, 1), 0) % w_rows
        kill = ((j == 0) & (t_idx == 0)) | ((j == last) & (t_idx == tl + 1))
        h = jnp.where(kill, 0.0, h).astype(compute_dtype)

        # ---- conv2: same single-matmul + shifted-output structure.
        q = jnp.dot(h, w2_ref[...], preferred_element_type=jnp.float32)     # (m-2, 3C)
        y = (q[0:m - 4, 0:cp] + q[1:m - 3, cp:2 * cp] + q[2:m - 2, 2 * cp:3 * cp]
             + b2_ref[...])                                                 # (m-4, C)

        # ---- residual add + ReLU.  nb == 1 for the perf-relevant large-tile configs
        # (single full-block store); small nb unrolls to aligned tl-row stores.
        for b in range(nb):
            r0 = b * w_rows
            yb = y[r0:r0 + tl] + x2[r0 + 2:r0 + 2 + tl].astype(jnp.float32)
            o_ref[b] = jnp.maximum(yb, 0.0).astype(o_ref.dtype)

    return kernel


def basic_block_forward(x_ncl, w1, w2, gamma1, beta1, mean1, var1,
                        gamma2, beta2, mean2, var2,
                        eps=1e-5, compute_dtype=None, max_tl=512):
    """BasicBlock forward. x_ncl: (N, C, L) as in PyTorch Conv1d. Returns (N, C, L)."""
    N, C, L = x_ncl.shape
    out_dtype = x_ncl.dtype
    cdt = jnp.dtype(out_dtype if compute_dtype is None else compute_dtype)

    # TODO(synk): for tiny channel counts (C <= 32) padding C to 128 wastes MXU lanes
    # and HBM bandwidth; a dedicated L-on-lanes layout for that regime is not done.
    c_pad = _round_up(max(C, 128), 128)

    vmem_cap = _vmem_capacity_bytes()
    # Leave room for the two (double-buffered) (C, 3C) weight slabs + pipeline bufs.
    w_bytes = 2 * c_pad * (3 * c_pad) * cdt.itemsize
    budget = max(1 << 19, (vmem_cap - 4 * w_bytes - (8 << 20)) // 16)
    tl = _choose_tl(L, c_pad, cdt.itemsize, budget, max_tl)
    n_tiles = L // tl
    w_rows = tl + 8                      # halo window rows (multiple of 8 when tl is)

    # Fold batches into the matmul M dimension (target ~512 rows), nb | N (no batch
    # padding), and keep >= 2 grid steps so both v7x TensorCores get work.
    nb = _largest_divisor_leq(N, max(1, 512 // tl))
    if w_rows % 8 != 0:
        nb = 1                           # fallback tl: keep per-batch rows aligned
    while nb > 1 and (N // nb) * n_tiles < 2:
        nb = _largest_divisor_leq(N, nb - 1)
    G = N // nb

    # ---- layout plumbing: NCL -> NLC, pad channels, cast ----------------------
    x = jnp.transpose(x_ncl, (0, 2, 1)).astype(cdt)                   # (N, L, C)
    x = jnp.pad(x, ((0, 0), (0, 0), (0, c_pad - C)))                  # (N, L, Cp)

    # ---- halo-extended windows, pre-grouped so each grid step is one block ----
    xp = jnp.pad(x, ((0, 0), (2, w_rows - tl - 2), (0, 0)))           # (N, L+8, Cp)
    r = jnp.arange(nb * w_rows)
    bidx = (jnp.arange(G) * nb)[:, None, None] + (r // w_rows)[None, None, :]
    pidx = (jnp.arange(n_tiles) * tl)[None, :, None] + (r % w_rows)[None, None, :]
    xw = xp[bidx, pidx, :]                                            # (G, T, nb*W, Cp)

    # ---- fold eval-mode BN scale into conv weights; keep per-channel bias -----
    s1 = gamma1 / jnp.sqrt(var1 + eps)
    s2 = gamma2 / jnp.sqrt(var2 + eps)
    # PyTorch Conv1d weight (Cout, Cin, K) -> tap-major (K, Cin, Cout), scaled by s[cout]
    w1_t = jnp.transpose(w1, (2, 1, 0)) * s1[None, None, :]
    w2_t = jnp.transpose(w2, (2, 1, 0)) * s2[None, None, :]
    w1_t = jnp.pad(w1_t, ((0, 0), (0, c_pad - C), (0, c_pad - C)))
    w2_t = jnp.pad(w2_t, ((0, 0), (0, c_pad - C), (0, c_pad - C)))
    # Lane-concatenate the 3 taps along Cout: each conv becomes ONE (M,C)@(C,3C) matmul.
    w1_cat = jnp.transpose(w1_t, (1, 0, 2)).reshape(c_pad, 3 * c_pad).astype(cdt)
    w2_cat = jnp.transpose(w2_t, (1, 0, 2)).reshape(c_pad, 3 * c_pad).astype(cdt)
    b1_p = jnp.pad(beta1 - mean1 * s1, (0, c_pad - C)).astype(jnp.float32).reshape(1, c_pad)
    b2_p = jnp.pad(beta2 - mean2 * s2, (0, c_pad - C)).astype(jnp.float32).reshape(1, c_pad)

    kernel = _make_kernel(nb, tl, w_rows, c_pad, cdt)
    # TODO(synk): the constant weight blocks are still double-buffered by the default
    # pipeline; single-buffering them (pl.Buffered(1)) would halve weight VMEM on v7x.
    vmem_limit = int(max(32 * 1024 * 1024,
                         min(vmem_cap * 3 // 4, 112 * 1024 * 1024)))
    out = pl.pallas_call(
        kernel,
        out_shape=jax.ShapeDtypeStruct((N, L, c_pad), out_dtype),
        grid_spec=pltpu.PrefetchScalarGridSpec(
            num_scalar_prefetch=0,
            grid=(G, n_tiles),
            in_specs=[
                pl.BlockSpec((1, 1, nb * w_rows, c_pad), lambda g, j: (g, j, 0, 0)),
                pl.BlockSpec((c_pad, 3 * c_pad), lambda g, j: (0, 0)),   # w1 (BN-folded)
                pl.BlockSpec((c_pad, 3 * c_pad), lambda g, j: (0, 0)),   # w2 (BN-folded)
                pl.BlockSpec((1, c_pad), lambda g, j: (0, 0)),           # bn1 bias
                pl.BlockSpec((1, c_pad), lambda g, j: (0, 0)),           # bn2 bias
            ],
            out_specs=pl.BlockSpec((nb, tl, c_pad), lambda g, j: (g, j, 0)),
        ),
        compiler_params=pltpu.CompilerParams(
            dimension_semantics=("parallel", "parallel"),
            vmem_limit_bytes=vmem_limit),
    )(xw, w1_cat, w2_cat, b1_p, b2_p)

    # strip channel padding, NLC -> NCL
    return jnp.transpose(out[:, :, :C], (0, 2, 1))


def _reference_forward(x_ncl, w1, w2, gamma1, beta1, mean1, var1,
                       gamma2, beta2, mean2, var2, eps=1e-5):
    """Plain-JAX reference matching PyTorch semantics (Conv1d NCL, eval-mode BN)."""
    def conv1d(x, w):
        return jax.lax.conv_general_dilated(
            x, w, window_strides=(1,), padding=((1, 1),),
            dimension_numbers=("NCH", "OIH", "NCH"),
            precision=jax.lax.Precision.HIGHEST)

    def bn(x, g, b, m, v):
        g = g[None, :, None]; b = b[None, :, None]
        m = m[None, :, None]; v = v[None, :, None]
        return (x - m) / jnp.sqrt(v + eps) * g + b

    identity = x_ncl
    out = conv1d(x_ncl, w1)
    out = jax.nn.relu(bn(out, gamma1, beta1, mean1, var1))
    out = conv1d(out, w2)
    out = bn(out, gamma2, beta2, mean2, var2)
    return jax.nn.relu(out + identity)


if __name__ == "__main__":
    # Small synthetic config: inplanes = planes = 8, stride = 1, downsample = None,
    # sequence length 16, batch 2.
    N, C, L = 2, 8, 16
    key = jax.random.PRNGKey(0)
    keys = jax.random.split(key, 10)

    x = jax.random.normal(keys[0], (N, C, L), dtype=jnp.float32)
    w1 = jax.random.normal(keys[1], (C, C, 3), dtype=jnp.float32) * 0.2
    w2 = jax.random.normal(keys[2], (C, C, 3), dtype=jnp.float32) * 0.2

    # BatchNorm parameters (inference mode / running stats).
    # TODO(synk): training-mode batch statistics (and the PyTorch BatchNorm2d-on-3D
    # quirk) are not reproduced; eval-mode per-channel affine BN is implemented.
    gamma1 = 1.0 + 0.1 * jax.random.normal(keys[3], (C,), dtype=jnp.float32)
    beta1 = 0.1 * jax.random.normal(keys[4], (C,), dtype=jnp.float32)
    mean1 = 0.1 * jax.random.normal(keys[5], (C,), dtype=jnp.float32)
    var1 = 1.0 + 0.1 * jax.nn.softplus(jax.random.normal(keys[6], (C,), dtype=jnp.float32))
    gamma2 = 1.0 + 0.1 * jax.random.normal(keys[7], (C,), dtype=jnp.float32)
    beta2 = 0.1 * jax.random.normal(keys[8], (C,), dtype=jnp.float32)
    mean2 = 0.1 * jax.random.normal(keys[9], (C,), dtype=jnp.float32)
    var2 = jnp.ones((C,), dtype=jnp.float32) * 1.3

    args = (x, w1, w2, gamma1, beta1, mean1, var1, gamma2, beta2, mean2, var2)
    ref = _reference_forward(*args)

    # Default path: single L tile (TL = 16), nb = 1, grid = (2, 1).
    out = jax.block_until_ready(jax.jit(basic_block_forward)(*args))
    assert out.shape == (N, C, L)
    assert jnp.allclose(out, ref, atol=1e-4, rtol=1e-4), "mismatch (single-tile path)"

    # Force the multi-tile halo path (TL = 8 -> 2 L-tiles, nb = 2 batch fold).
    out_tiled = jax.block_until_ready(
        jax.jit(functools.partial(basic_block_forward, max_tl=8))(*args))
    assert jnp.allclose(out_tiled, ref, atol=1e-4, rtol=1e-4), "mismatch (tiled path)"

    # bf16 compute path (v6e/v7x MXU-native); f32 accumulate, documented rounding of
    # the intermediate activation and residual.
    out_bf16 = jax.block_until_ready(
        jax.jit(functools.partial(basic_block_forward, compute_dtype=jnp.bfloat16))(*args))
    assert jnp.allclose(out_bf16, ref, atol=1.5e-1, rtol=5e-2), "mismatch (bf16 path)"

    print("KERNEL_OK")
</pallas_src>

<mosaic_0001>
module attributes {stable_mosaic.version = 11 : i64} {
  func.func @kernel(%arg0: i32, %arg1: i32, %arg2: memref<1x1x24x128xf32, #tpu.memory_space<vmem>>, %arg3: memref<128x384xf32, #tpu.memory_space<vmem>>, %arg4: memref<128x384xf32, #tpu.memory_space<vmem>>, %arg5: memref<1x128xf32, #tpu.memory_space<vmem>>, %arg6: memref<1x128xf32, #tpu.memory_space<vmem>>, %arg7: memref<1x16x128xf32, #tpu.memory_space<vmem>>) attributes {dimension_semantics = [#tpu.dimension_semantics<parallel>, #tpu.dimension_semantics<parallel>], iteration_bounds = array<i64: 2, 1>, scalar_prefetch = 0 : i64, scratch_operands = 0 : i64, tpu.core_type = #tpu.core_type<tc>, window_params = [{transform_indices = @transform_0, window_bounds = array<i64: 1, 1, 24, 128>}, {pipeline_mode = #tpu.pipeline_mode<synchronous>, transform_indices = @transform_1, window_bounds = array<i64: 128, 384>}, {pipeline_mode = #tpu.pipeline_mode<synchronous>, transform_indices = @transform_2, window_bounds = array<i64: 128, 384>}, {pipeline_mode = #tpu.pipeline_mode<synchronous>, transform_indices = @transform_3, window_bounds = array<i64: 1, 128>}, {pipeline_mode = #tpu.pipeline_mode<synchronous>, transform_indices = @transform_4, window_bounds = array<i64: 1, 128>}, {transform_indices = @transform_5, window_bounds = array<i64: 1, 16, 128>}]} {
    %c0 = arith.constant 0 : index
    %c0_0 = arith.constant 0 : index
    %c0_1 = arith.constant 0 : index
    %c0_2 = arith.constant 0 : index
    %0 = vector.load %arg2[%c0, %c0_0, %c0_1, %c0_2] : memref<1x1x24x128xf32, #tpu.memory_space<vmem>>, vector<1x1x24x128xf32>
    %1 = vector.shape_cast %0 : vector<1x1x24x128xf32> to vector<24x128xf32>
    %c0_3 = arith.constant 0 : index
    %c0_4 = arith.constant 0 : index
    %2 = vector.load %arg3[%c0_3, %c0_4] : memref<128x384xf32, #tpu.memory_space<vmem>>, vector<128x384xf32>
    %cst = arith.constant dense<0.000000e+00> : vector<24x384xf32>
    %3 = tpu.matmul %1, %2, %cst {dimension_numbers = #tpu.dot_dimension_numbers<[1], [0], [0], [1], [0, 0, 1, 1], [], []>} : vector<24x128xf32>, vector<128x384xf32>, vector<24x384xf32> -> vector<24x384xf32>
    %4 = vector.extract_strided_slice %3 {offsets = [0, 0], sizes = [22, 128], strides = [1, 1]} : vector<24x384xf32> to vector<22x128xf32>
    %5 = vector.extract_strided_slice %3 {offsets = [1, 128], sizes = [22, 128], strides = [1, 1]} : vector<24x384xf32> to vector<22x128xf32>
    %6 = arith.addf %4, %5 : vector<22x128xf32>
    %7 = vector.extract_strided_slice %3 {offsets = [2, 256], sizes = [22, 128], strides = [1, 1]} : vector<24x384xf32> to vector<22x128xf32>
    %8 = arith.addf %6, %7 : vector<22x128xf32>
    %c0_5 = arith.constant 0 : index
    %c0_6 = arith.constant 0 : index
    %9 = vector.load %arg5[%c0_5, %c0_6] : memref<1x128xf32, #tpu.memory_space<vmem>>, vector<1x128xf32>
    %10 = vector.broadcast %9 : vector<1x128xf32> to vector<22x128xf32>
    %11 = arith.addf %8, %10 : vector<22x128xf32>
    %cst_7 = arith.constant 0.000000e+00 : f32
    %12 = vector.broadcast %cst_7 : f32 to vector<22x128xf32>
    %13 = arith.maximumf %11, %12 : vector<22x128xf32>
    %14 = tpu.iota {dimensions = array<i32: 0>} : vector<22x1xi32>
    %c24_i32 = arith.constant 24 : i32
    %c0_i32 = arith.constant 0 : i32
    %15 = arith.cmpi eq, %c24_i32, %c0_i32 : i32
    %c1_i32 = arith.constant 1 : i32
    %16 = arith.select %15, %c1_i32, %c24_i32 : i32
    %17 = vector.broadcast %16 : i32 to vector<22x1xi32>
    %18 = arith.remsi %14, %17 : vector<22x1xi32>
    %c0_i32_8 = arith.constant 0 : i32
    %19 = vector.broadcast %c0_i32_8 : i32 to vector<22x1xi32>
    %20 = arith.cmpi ne, %18, %19 : vector<22x1xi32>
    %c0_i32_9 = arith.constant 0 : i32
    %21 = vector.broadcast %c0_i32_9 : i32 to vector<22x1xi32>
    %22 = arith.cmpi slt, %18, %21 : vector<22x1xi32>
    %c0_i32_10 = arith.constant 0 : i32
    %23 = arith.cmpi slt, %16, %c0_i32_10 : i32
    %24 = vector.broadcast %23 : i1 to vector<22x1xi1>
    %25 = vector.broadcast %24 : vector<22x1xi1> to vector<22x1xi1>
    %26 = arith.xori %22, %25 : vector<22x1xi1>
    %27 = arith.andi %26, %20 : vector<22x1xi1>
    %28 = vector.broadcast %16 : i32 to vector<22x1xi32>
    %29 = arith.addi %18, %28 : vector<22x1xi32>
    %30 = arith.select %27, %29, %18 : vector<22x1xi1>, vector<22x1xi32>
    %c0_i32_11 = arith.constant 0 : i32
    %31 = arith.cmpi eq, %arg1, %c0_i32_11 : i32
    %c0_i32_12 = arith.constant 0 : i32
    %32 = vector.broadcast %c0_i32_12 : i32 to vector<22x1xi32>
    %33 = arith.cmpi eq, %30, %32 : vector<22x1xi32>
    %34 = vector.broadcast %31 : i1 to vector<22x1xi1>
    %35 = arith.andi %34, %33 : vector<22x1xi1>
    %c0_i32_13 = arith.constant 0 : i32
    %36 = arith.cmpi eq, %arg1, %c0_i32_13 : i32
    %c17_i32 = arith.constant 17 : i32
    %37 = vector.broadcast %c17_i32 : i32 to vector<22x1xi32>
    %38 = arith.cmpi eq, %30, %37 : vector<22x1xi32>
    %39 = vector.broadcast %36 : i1 to vector<22x1xi1>
    %40 = arith.andi %39, %38 : vector<22x1xi1>
    %41 = arith.ori %35, %40 : vector<22x1xi1>
    %cst_14 = arith.constant 0.000000e+00 : f32
    %42 = vector.shape_cast %41 : vector<22x1xi1> to vector<22x1xi1>
    %43 = vector.broadcast %42 : vector<22x1xi1> to vector<22x128xi1>
    %44 = vector.broadcast %cst_14 : f32 to vector<22x128xf32>
    %45 = arith.select %43, %44, %13 : vector<22x128xi1>, vector<22x128xf32>
    %c0_15 = arith.constant 0 : index
    %c0_16 = arith.constant 0 : index
    %46 = vector.load %arg4[%c0_15, %c0_16] : memref<128x384xf32, #tpu.memory_space<vmem>>, vector<128x384xf32>
    %cst_17 = arith.constant dense<0.000000e+00> : vector<22x384xf32>
    %47 = tpu.matmul %45, %46, %cst_17 {dimension_numbers = #tpu.dot_dimension_numbers<[1], [0], [0], [1], [0, 0, 1, 1], [], []>} : vector<22x128xf32>, vector<128x384xf32>, vector<22x384xf32> -> vector<22x384xf32>
    %48 = vector.extract_strided_slice %47 {offsets = [0, 0], sizes = [20, 128], strides = [1, 1]} : vector<22x384xf32> to vector<20x128xf32>
    %49 = vector.extract_strided_slice %47 {offsets = [1, 128], sizes = [20, 128], strides = [1, 1]} : vector<22x384xf32> to vector<20x128xf32>
    %50 = arith.addf %48, %49 : vector<20x128xf32>
    %51 = vector.extract_strided_slice %47 {offsets = [2, 256], sizes = [20, 128], strides = [1, 1]} : vector<22x384xf32> to vector<20x128xf32>
    %52 = arith.addf %50, %51 : vector<20x128xf32>
    %c0_18 = arith.constant 0 : index
    %c0_19 = arith.constant 0 : index
    %53 = vector.load %arg6[%c0_18, %c0_19] : memref<1x128xf32, #tpu.memory_space<vmem>>, vector<1x128xf32>
    %54 = vector.broadcast %53 : vector<1x128xf32> to vector<20x128xf32>
    %55 = arith.addf %52, %54 : vector<20x128xf32>
    %56 = vector.extract_strided_slice %55 {offsets = [0, 0], sizes = [16, 128], strides = [1, 1]} : vector<20x128xf32> to vector<16x128xf32>
    %57 = vector.extract_strided_slice %1 {offsets = [2, 0], sizes = [16, 128], strides = [1, 1]} : vector<24x128xf32> to vector<16x128xf32>
    %58 = arith.addf %56, %57 : vector<16x128xf32>
    %cst_20 = arith.constant 0.000000e+00 : f32
    %59 = vector.broadcast %cst_20 : f32 to vector<16x128xf32>
    %60 = arith.maximumf %58, %59 : vector<16x128xf32>
    %c0_21 = arith.constant 0 : index
    %c0_22 = arith.constant 0 : index
    %c0_23 = arith.constant 0 : index
    %61 = vector.load %arg7[%c0_21, %c0_22, %c0_23] : memref<1x16x128xf32, #tpu.memory_space<vmem>>, vector<1x16x128xf32>
    %62 = vector.shape_cast %61 : vector<1x16x128xf32> to vector<16x128xf32>
    %63 = vector.shape_cast %60 : vector<16x128xf32> to vector<1x16x128xf32>
    tpu.vector_store %arg7[%c0_21, %c0_22, %c0_23], %63 {strides = array<i32>} : memref<1x16x128xf32, #tpu.memory_space<vmem>>, vector<1x16x128xf32>,
    return
  }
  func.func @transform_0(%arg0: i32, %arg1: i32) -> (i32, i32, i32, i32) {
    %c0_i32 = arith.constant 0 : i32
    %c0_i32_0 = arith.constant 0 : i32
    %c0_i32_1 = arith.constant 0 : i32
    return %arg0, %arg1, %c0_i32, %c0_i32_0 : i32, i32, i32, i32
  }
  func.func @transform_1(%arg0: i32, %arg1: i32) -> (i32, i32) {
    %c0_i32 = arith.constant 0 : i32
    %c0_i32_0 = arith.constant 0 : i32
    %c0_i32_1 = arith.constant 0 : i32
    return %c0_i32, %c0_i32_0 : i32, i32
  }
  func.func @transform_2(%arg0: i32, %arg1: i32) -> (i32, i32) {
    %c0_i32 = arith.constant 0 : i32
    %c0_i32_0 = arith.constant 0 : i32
    %c0_i32_1 = arith.constant 0 : i32
    return %c0_i32, %c0_i32_0 : i32, i32
  }
  func.func @transform_3(%arg0: i32, %arg1: i32) -> (i32, i32) {
    %c0_i32 = arith.constant 0 : i32
    %c0_i32_0 = arith.constant 0 : i32
    %c0_i32_1 = arith.constant 0 : i32
    return %c0_i32, %c0_i32_0 : i32, i32
  }
  func.func @transform_4(%arg0: i32, %arg1: i32) -> (i32, i32) {
    %c0_i32 = arith.constant 0 : i32
    %c0_i32_0 = arith.constant 0 : i32
    %c0_i32_1 = arith.constant 0 : i32
    return %c0_i32, %c0_i32_0 : i32, i32
  }
  func.func @transform_5(%arg0: i32, %arg1: i32) -> (i32, i32, i32) {
    %c0_i32 = arith.constant 0 : i32
    %c0_i32_0 = arith.constant 0 : i32
    return %arg0, %arg1, %c0_i32 : i32, i32, i32
  }
}

</mosaic_0001>

<llo_original>
// kernel: basic_block_forward.1
$region0: #{basic_block_forward.1}
  #allocation0 [shape = 'u32[]', space=smem, size = 0x4, offset = 0x4, fixed_abs, tag = 'smem constant byte address 0x4 - core index']
  #allocation1 [shape = 'u32[72,128]{1,0:T(1,128)}', space=vmem, size = 0x9000, scoped, tag = 'internal scratch']
  %s0 = inlined_call_operand.vmem [shape: f32[2,1,24,128], index: 0, kind: input, shape index: {}]
  %s1 = inlined_call_operand.vmem [shape: f32[128,384], index: 1, kind: input, shape index: {}]
  %s2 = inlined_call_operand.vmem [shape: f32[128,384], index: 2, kind: input, shape index: {}]
  %s3 = inlined_call_operand.vmem [shape: f32[1,128], index: 3, kind: input, shape index: {}]
  %s4 = inlined_call_operand.vmem [shape: f32[1,128], index: 4, kind: input, shape index: {}]
  %s5 = inlined_call_operand.vmem [shape: f32[2,16,128], index: 5, kind: output, shape index: {}]
  %s6 = sld [smem:[#allocation0]]
  $region53: #{basic_block_forward.1} parent=0
    _
  %s8 = ssub.s32 1, %s6
  %s9 = scalar_select 0, %s8, %s6
  loop: start=0, step=1, limit=4
  $region2: #{basic_block_forward.1} parent=0 // loop_pre_header
    _
  $region3: #{basic_block_forward.1} parent=0 // loop_header
    %s11 = sphi 0, %s15
    %p12 = scmp.ge.s32.totalorder %s11, 4
    %s18 = sphi 0, %s30
    %s19 = sphi 0, %s26
    %s20 = sphi 0, %s18
    %s21 = sphi 0, %s19
    %s22 = sphi 0, %s20
    %s23 = sphi 0, %s21
    %s35 = sphi 0, %s37
    %s38 = sphi 0, %s35
    %s39 = sphi 0, %s38
    %s55 = sphi 0, %s39
    %s59 = sphi 0, %s59
    %s61 = sphi 0, %s59
    %s62 = sphi 0, %s61
    %s76 = sphi 0, %s62
    %s80 = sphi 0, %s80
    %s82 = sphi 0, %s80
    %s83 = sphi 0, %s82
    %s97 = sphi 0, %s83
    %s101 = sphi 0, %s101
    %s103 = sphi 0, %s101
    %s104 = sphi 0, %s103
    %s118 = sphi 0, %s104
    %s122 = sphi 0, %s122
    %s124 = sphi 0, %s122
    %s125 = sphi 0, %s124
    %s139 = sphi 0, %s125
    %s147 = sphi 0, %s149
    %s150 = sphi 0, %s147
    %s151 = sphi 0, %s150
    %s167 = sphi 0, %s151
  $region4: #{basic_block_forward.1} parent=0 // loop_header_branch
    %14 = sbr.rel (%p12) target = $region8
  $region5: #{basic_block_forward.1} parent=0 // loop_body
    %s16 = ssub.s32 %s11, 1
    %s17 = ssub.s32 %s11, 2
    %s24 = sadd.s32 1, %s19
    %p25 = scmp.ge.s32.totalorder %s24, 1
    %s26 = scalar_select %p25, 0, %s24
    %s27 = sadd.s32 1, %s18
    %s28 = scalar_select %p25, %s27, %s18
    %p29 = scmp.ge.s32.totalorder %s28, 2
    %s30 = scalar_select %p29, 0, %s28
    %s31 = ssub.s32 %s18, %s30
    %s32 = ssub.s32 %s19, %s26
    %s33 = sor.u32 %s31, %s32
    %p34 = scmp.eq.s32.totalorder %s33, 0
    %s36 = sadd.s32 %s35, 1
    %s37 = scalar_select %p34, %s35, %s36
    %p40 = pneg %p34
    %p41 = scmp.eq.s32.totalorder %s11, 1
    %p42 = por %p40, %p41
    %p43 = scmp.ne.s32.totalorder %s35, %s38
    %p44 = scmp.eq.s32.totalorder %s11, 0
    %p45 = por %p43, %p44
    %p46 = scmp.ne.s32.totalorder %s35, %s38
    %p47 = scmp.eq.s32.totalorder %s16, 1
    %p48 = por %p46, %p47
    %p49 = scmp.ne.s32.totalorder %s38, %s39
    %p50 = scmp.eq.s32.totalorder %s16, 0
    %p51 = por %p49, %p50
    %p52 = scmp.ne.s32.totalorder %s38, %s39
    %p53 = scmp.eq.s32.totalorder %s17, 1
    %p54 = por %p52, %p53
    %p56 = scmp.ne.s32.totalorder %s39, %s55
    %p57 = scmp.eq.s32.totalorder %s17, 0
    %p58 = por %p56, %p57
    %s60 = sadd.s32 %s59, 1
    %p63 = scmp.eq.s32.totalorder %s11, 1
    %p64 = scmp.ne.s32.totalorder %s59, %s61
    %p65 = scmp.eq.s32.totalorder %s11, 0
    %p66 = por %p64, %p65
    %p67 = scmp.ne.s32.totalorder %s59, %s61
    %p68 = scmp.eq.s32.totalorder %s16, 1
    %p69 = por %p67, %p68
    %p70 = scmp.ne.s32.totalorder %s61, %s62
    %p71 = scmp.eq.s32.totalorder %s16, 0
    %p72 = por %p70, %p71
    %p73 = scmp.ne.s32.totalorder %s61, %s62
    %p74 = scmp.eq.s32.totalorder %s17, 1
    %p75 = por %p73, %p74
    %p77 = scmp.ne.s32.totalorder %s62, %s76
    %p78 = scmp.eq.s32.totalorder %s17, 0
    %p79 = por %p77, %p78
    %s81 = sadd.s32 %s80, 1
    %p84 = scmp.eq.s32.totalorder %s11, 1
    %p85 = scmp.ne.s32.totalorder %s80, %s82
    %p86 = scmp.eq.s32.totalorder %s11, 0
    %p87 = por %p85, %p86
    %p88 = scmp.ne.s32.totalorder %s80, %s82
    %p89 = scmp.eq.s32.totalorder %s16, 1
    %p90 = por %p88, %p89
    %p91 = scmp.ne.s32.totalorder %s82, %s83
    %p92 = scmp.eq.s32.totalorder %s16, 0
    %p93 = por %p91, %p92
    %p94 = scmp.ne.s32.totalorder %s82, %s83
    %p95 = scmp.eq.s32.totalorder %s17, 1
    %p96 = por %p94, %p95
    %p98 = scmp.ne.s32.totalorder %s83, %s97
    %p99 = scmp.eq.s32.totalorder %s17, 0
    %p100 = por %p98, %p99
    %s102 = sadd.s32 %s101, 1
    %p105 = scmp.eq.s32.totalorder %s11, 1
    %p106 = scmp.ne.s32.totalorder %s101, %s103
    %p107 = scmp.eq.s32.totalorder %s11, 0
    %p108 = por %p106, %p107
    %p109 = scmp.ne.s32.totalorder %s101, %s103
    %p110 = scmp.eq.s32.totalorder %s16, 1
    %p111 = por %p109, %p110
    %p112 = scmp.ne.s32.totalorder %s103, %s104
    %p113 = scmp.eq.s32.totalorder %s16, 0
    %p114 = por %p112, %p113
    %p115 = scmp.ne.s32.totalorder %s103, %s104
    %p116 = scmp.eq.s32.totalorder %s17, 1
    %p117 = por %p115, %p116
    %p119 = scmp.ne.s32.totalorder %s104, %s118
    %p120 = scmp.eq.s32.totalorder %s17, 0
    %p121 = por %p119, %p120
    %s123 = sadd.s32 %s122, 1
    %p126 = scmp.eq.s32.totalorder %s11, 1
    %p127 = scmp.ne.s32.totalorder %s122, %s124
    %p128 = scmp.eq.s32.totalorder %s11, 0
    %p129 = por %p127, %p128
    %p130 = scmp.ne.s32.totalorder %s122, %s124
    %p131 = scmp.eq.s32.totalorder %s16, 1
    %p132 = por %p130, %p131
    %p133 = scmp.ne.s32.totalorder %s124, %s125
    %p134 = scmp.eq.s32.totalorder %s16, 0
    %p135 = por %p133, %p134
    %p136 = scmp.ne.s32.totalorder %s124, %s125
    %p137 = scmp.eq.s32.totalorder %s17, 1
    %p138 = por %p136, %p137
    %p140 = scmp.ne.s32.totalorder %s125, %s139
    %p141 = scmp.eq.s32.totalorder %s17, 0
    %p142 = por %p140, %p141
    %s143 = ssub.s32 %s18, %s30
    %s144 = ssub.s32 %s19, %s26
    %s145 = sor.u32 %s143, %s144
    %p146 = scmp.eq.s32.totalorder %s145, 0
    %s148 = sadd.s32 %s147, 1
    %s149 = scalar_select %p146, %s147, %s148
    %p152 = pneg %p146
    %p153 = scmp.eq.s32.totalorder %s11, 1
    %p154 = por %p152, %p153
    %p155 = scmp.ne.s32.totalorder %s147, %s150
    %p156 = scmp.eq.s32.totalorder %s11, 0
    %p157 = por %p155, %p156
    %p158 = scmp.ne.s32.totalorder %s147, %s150
    %p159 = scmp.eq.s32.totalorder %s16, 1
    %p160 = por %p158, %p159
    %p161 = scmp.ne.s32.totalorder %s150, %s151
    %p162 = scmp.eq.s32.totalorder %s16, 0
    %p163 = por %p161, %p162
    %p164 = scmp.ne.s32.totalorder %s150, %s151
    %p165 = scmp.eq.s32.totalorder %s17, 1
    %p166 = por %p164, %p165
    %p168 = scmp.ne.s32.totalorder %s151, %s167
    %p169 = scmp.eq.s32.totalorder %s17, 0
    %p170 = por %p168, %p169
    %p171 = scmp.le.s32.totalorder 1, %s11
    %p172 = scmp.lt.s32.totalorder %s11, 3
    %p173 = pnand %p171, %p172
    %p174 = pneg %p173
    // Predicated region
    $region9: #{basic_block_forward.1} parent=5 // pred_check
      _
    $region10: #{basic_block_forward.1} parent=5 // pred_check_branch
      %176 = sbr.rel (%p173) target = $region12
    $region11: #{basic_block_forward.1} parent=5 // pred_region
      %s177 = ssub.s32 %s11, 1
      // Predicated region
      $region13: #{basic_block_forward.1} parent=11 // pred_check
        %p178 = pneg %p72
      $region14: #{basic_block_forward.1} parent=11 // pred_check_branch
        %180 = sbr.rel (%p178) target = $region16
      $region15: #{basic_block_forward.1} parent=11 // pred_region
        _
      $region16: #{basic_block_forward.1} parent=11 // pred_fallthru
        _
      // Predicated region
      $region17: #{basic_block_forward.1} parent=11 // pred_check
        %p181 = pneg %p93
      $region18: #{basic_block_forward.1} parent=11 // pred_check_branch
        %183 = sbr.rel (%p181) target = $region20
      $region19: #{basic_block_forward.1} parent=11 // pred_region
        _
      $region20: #{basic_block_forward.1} parent=11 // pred_fallthru
        _
      // Predicated region
      $region21: #{basic_block_forward.1} parent=11 // pred_check
        %p184 = pneg %p114
      $region22: #{basic_block_forward.1} parent=11 // pred_check_branch
        %186 = sbr.rel (%p184) target = $region24
      $region23: #{basic_block_forward.1} parent=11 // pred_region
        _
      $region24: #{basic_block_forward.1} parent=11 // pred_fallthru
        _
      // Predicated region
      $region25: #{basic_block_forward.1} parent=11 // pred_check
        %p187 = pneg %p135
      $region26: #{basic_block_forward.1} parent=11 // pred_check_branch
        %189 = sbr.rel (%p187) target = $region28
      $region27: #{basic_block_forward.1} parent=11 // pred_region
        _
      $region28: #{basic_block_forward.1} parent=11 // pred_fallthru
        _
    $region12: #{basic_block_forward.1} parent=5 // pred_fallthru
      _
    %p190 = scmp.lt.s32.totalorder %s11, 2
    // Predicated region
    $region29: #{basic_block_forward.1} parent=5 // pred_check
      %p191 = pneg %p190
    $region30: #{basic_block_forward.1} parent=5 // pred_check_branch
      %193 = sbr.rel (%p191) target = $region32
    $region31: #{basic_block_forward.1} parent=5 // pred_region
      // Predicated region
      $region33: #{basic_block_forward.1} parent=31 // pred_check
        %p194 = pneg %p45
      $region34: #{basic_block_forward.1} parent=31 // pred_check_branch
        %196 = sbr.rel (%p194) target = $region36
      $region35: #{basic_block_forward.1} parent=31 // pred_region
        %p197 = scmp.lt.s32.totalorder %s18, 1
        %s198 = scalar_select %p197, %s18, 1
        %p199 = scmp.lt.s32.totalorder %s19, 0
        %s200 = scalar_select %p199, %s19, 0
        %s201 = smul.addr %s200, 3
        %s202 = smul.addr %s198, 3
        %s203 = sadd.s32 %s201, %s202
        %s204 = smul.addr %s203, 8
        %s205 = scalar_lea.vmem %s0, %s204
      $region36: #{basic_block_forward.1} parent=31 // pred_fallthru
        _
    $region32: #{basic_block_forward.1} parent=5 // pred_fallthru
      _
    %p206 = scmp.le.s32.totalorder 1, %s11
    %p207 = scmp.lt.s32.totalorder %s11, 3
    %p208 = pnand %p206, %p207
    %p209 = pneg %p208
    // Predicated region
    $region37: #{basic_block_forward.1} parent=5 // pred_check
      _
    $region38: #{basic_block_forward.1} parent=5 // pred_check_branch
      %211 = sbr.rel (%p208) target = $region40
    $region39: #{basic_block_forward.1} parent=5 // pred_region
      %s212 = ssub.s32 %s11, 1
      %p213 = scmp.lt.s32.totalorder %s20, 1
      %s214 = scalar_select %p213, %s20, 1
      %p215 = scmp.lt.s32.totalorder %s21, 0
      %s216 = scalar_select %p215, %s21, 0
      %s217 = smul.addr %s216, 3
      %s218 = smul.addr %s214, 3
      %s219 = sadd.s32 %s217, %s218
      %s220 = smul.addr %s219, 8
      %s221 = scalar_lea.vmem %s0, %s220
      %p222 = pneg %p51
      %p223 = pneg %p48
      %p224 = pneg %p72
      %p225 = pneg %p69
      %p226 = pneg %p93
      %p227 = pneg %p90
      %p228 = pneg %p114
      %p229 = pneg %p111
      %p230 = pneg %p135
      %p231 = pneg %p132
      %p232 = pneg %p163
      %p233 = pneg %p160
      %s234 = smul.u32 2, %s21
      %p235 = scmp.lt.s32.totalorder %s20, 1
      %s236 = scalar_select %p235, %s20, 1
      %p237 = scmp.lt.s32.totalorder %s234, 1
      %s238 = scalar_select %p237, %s234, 1
      %s239 = smul.addr %s236, 2
      %s240 = sadd.s32 %s238, %s239
      %s241 = smul.addr %s240, 8
      %s242 = scalar_lea.vmem %s5, %s241
      %p243 = scmp.lt.s32.totalorder %s20, 1
      %s244 = scalar_select %p243, %s20, 1
      %p245 = scmp.lt.s32.totalorder %s21, 0
      %s246 = scalar_select %p245, %s21, 0
      %s247 = smul.addr %s246, 3
      %s248 = smul.addr %s244, 3
      %s249 = sadd.s32 %s247, %s248
      %s250 = smul.addr %s249, 8
      %s251 = scalar_lea.vmem %s0, %s250
      %s252 = smul.u32 2, %s21
      %p253 = scmp.lt.s32.totalorder %s20, 1
      %s254 = scalar_select %p253, %s20, 1
      %p255 = scmp.lt.s32.totalorder %s252, 1
      %s256 = scalar_select %p255, %s252, 1
      %s257 = smul.addr %s254, 2
      %s258 = sadd.s32 %s256, %s257
      %s259 = smul.addr %s258, 8
      %s260 = scalar_lea.vmem %s5, %s259
      %s261 = smul.u32 2, %s21
      %v262 = vld [vmem:[%s251] sm:$0xff]
      %v263 = vld [vmem:[%s251 + $0x8] sm:$0xff]
      %v264 = vld [vmem:[%s251 + $0x10] sm:$0xff]
      %v265 = vld [vmem:[%s1] sm:$0xff]
      %v266 = vld [vmem:[%s1 + $0x8] sm:$0xff]
      %v267 = vld [vmem:[%s1 + $0x10] sm:$0xff]
      %v268 = vld [vmem:[%s1 + $0x18] sm:$0xff]
      %v269 = vld [vmem:[%s1 + $0x20] sm:$0xff]
      %v270 = vld [vmem:[%s1 + $0x28] sm:$0xff]
      %v271 = vld [vmem:[%s1 + $0x30] sm:$0xff]
      %v272 = vld [vmem:[%s1 + $0x38] sm:$0xff]
      %v273 = vld [vmem:[%s1 + $0x40] sm:$0xff]
      %v274 = vld [vmem:[%s1 + $0x48] sm:$0xff]
      %v275 = vld [vmem:[%s1 + $0x50] sm:$0xff]
      %v276 = vld [vmem:[%s1 + $0x58] sm:$0xff]
      %v277 = vld [vmem:[%s1 + $0x60] sm:$0xff]
      %v278 = vld [vmem:[%s1 + $0x68] sm:$0xff]
      %v279 = vld [vmem:[%s1 + $0x70] sm:$0xff]
      %v280 = vld [vmem:[%s1 + $0x78] sm:$0xff]
      %v281 = vld [vmem:[%s1 + $0x80] sm:$0xff]
      %v282 = vld [vmem:[%s1 + $0x88] sm:$0xff]
      %v283 = vld [vmem:[%s1 + $0x90] sm:$0xff]
      %v284 = vld [vmem:[%s1 + $0x98] sm:$0xff]
      %v285 = vld [vmem:[%s1 + $0xa0] sm:$0xff]
      %v286 = vld [vmem:[%s1 + $0xa8] sm:$0xff]
      %v287 = vld [vmem:[%s1 + $0xb0] sm:$0xff]
      %v288 = vld [vmem:[%s1 + $0xb8] sm:$0xff]
      %v289 = vld [vmem:[%s1 + $0xc0] sm:$0xff]
      %v290 = vld [vmem:[%s1 + $0xc8] sm:$0xff]
      %v291 = vld [vmem:[%s1 + $0xd0] sm:$0xff]
      %v292 = vld [vmem:[%s1 + $0xd8] sm:$0xff]
      %v293 = vld [vmem:[%s1 + $0xe0] sm:$0xff]
      %v294 = vld [vmem:[%s1 + $0xe8] sm:$0xff]
      %v295 = vld [vmem:[%s1 + $0xf0] sm:$0xff]
      %v296 = vld [vmem:[%s1 + $0xf8] sm:$0xff]
      %v297 = vld [vmem:[%s1 + $0x100] sm:$0xff]
      %v298 = vld [vmem:[%s1 + $0x108] sm:$0xff]
      %v299 = vld [vmem:[%s1 + $0x110] sm:$0xff]
      %v300 = vld [vmem:[%s1 + $0x118] sm:$0xff]
      %v301 = vld [vmem:[%s1 + $0x120] sm:$0xff]
      %v302 = vld [vmem:[%s1 + $0x128] sm:$0xff]
      %v303 = vld [vmem:[%s1 + $0x130] sm:$0xff]
      %v304 = vld [vmem:[%s1 + $0x138] sm:$0xff]
      %v305 = vld [vmem:[%s1 + $0x140] sm:$0xff]
      %v306 = vld [vmem:[%s1 + $0x148] sm:$0xff]
      %v307 = vld [vmem:[%s1 + $0x150] sm:$0xff]
      %v308 = vld [vmem:[%s1 + $0x158] sm:$0xff]
      %v309 = vld [vmem:[%s1 + $0x160] sm:$0xff]
      %v310 = vld [vmem:[%s1 + $0x168] sm:$0xff]
      %v311 = vld [vmem:[%s1 + $0x170] sm:$0xff]
      %v312 = vld [vmem:[%s1 + $0x178] sm:$0xff]
      %313 = vmatpush.msra.mxu0 %v310
      %314 = vmatpush.msra.mxu0 %v307
      %315 = vmatpush.msra.mxu0 %v304
      %316 = vmatpush.msra.mxu0 %v301
      %317 = vmatpush.msra.mxu0 %v298
      %318 = vmatpush.msra.mxu0 %v295
      %319 = vmatpush.msra.mxu0 %v292
      %320 = vmatpush.msra.mxu0 %v289
      %321 = vmatpush.msra.mxu0 %v286
      %322 = vmatpush.msra.mxu0 %v283
      %323 = vmatpush.msra.mxu0 %v280
      %324 = vmatpush.msra.mxu0 %v277
      %325 = vmatpush.msra.mxu0 %v274
      %326 = vmatpush.msra.mxu0 %v271
      %327 = vmatpush.msra.mxu0 %v268
      %328 = vmatpush.msra.mxu0 %v265
      %329 = vmatmul.f32.gmra.mxu0 %v262
      %v330 = vpop.f32.mrf.mxu0
      %v331 = vadd.f32 0.0, %v330
      %332 = vmatmul.f32.gmra.mxu0 %v263
      %v333 = vpop.f32.mrf.mxu0
      %v334 = vadd.f32 0.0, %v333
      %335 = vmatmul.f32.gmra.mxu0 %v264
      %v336 = vpop.f32.mrf.mxu0
      %v337 = vadd.f32 0.0, %v336
      %338 = vdwg.mxu0
      %339 = vmatpush.msra.mxu0 %v311
      %340 = vmatpush.msra.mxu0 %v308
      %341 = vmatpush.msra.mxu0 %v305
      %342 = vmatpush.msra.mxu0 %v302
      %343 = vmatpush.msra.mxu0 %v299
      %344 = vmatpush.msra.mxu0 %v296
      %345 = vmatpush.msra.mxu0 %v293
      %346 = vmatpush.msra.mxu0 %v290
      %347 = vmatpush.msra.mxu0 %v287
      %348 = vmatpush.msra.mxu0 %v284
      %349 = vmatpush.msra.mxu0 %v281
      %350 = vmatpush.msra.mxu0 %v278
      %351 = vmatpush.msra.mxu0 %v275
      %352 = vmatpush.msra.mxu0 %v272
      %353 = vmatpush.msra.mxu0 %v269
      %354 = vmatpush.msra.mxu0 %v266
      %355 = vmatmul.f32.gmra.mxu0 %v262
      %v356 = vpop.f32.mrf.mxu0
      %v357 = vadd.f32 0.0, %v356
      %358 = vmatmul.f32.gmra.mxu0 %v263
      %v359 = vpop.f32.mrf.mxu0
      %v360 = vadd.f32 0.0, %v359
      %361 = vmatmul.f32.gmra.mxu0 %v264
      %v362 = vpop.f32.mrf.mxu0
      %v363 = vadd.f32 0.0, %v362
      %364 = vdwg.mxu0
      %365 = vmatpush.msra.mxu0 %v312
      %366 = vmatpush.msra.mxu0 %v309
      %367 = vmatpush.msra.mxu0 %v306
      %368 = vmatpush.msra.mxu0 %v303
      %369 = vmatpush.msra.mxu0 %v300
      %370 = vmatpush.msra.mxu0 %v297
      %371 = vmatpush.msra.mxu0 %v294
      %372 = vmatpush.msra.mxu0 %v291
      %373 = vmatpush.msra.mxu0 %v288
      %374 = vmatpush.msra.mxu0 %v285
      %375 = vmatpush.msra.mxu0 %v282
      %376 = vmatpush.msra.mxu0 %v279
      %377 = vmatpush.msra.mxu0 %v276
      %378 = vmatpush.msra.mxu0 %v273
      %379 = vmatpush.msra.mxu0 %v270
      %380 = vmatpush.msra.mxu0 %v267
      %381 = vmatmul.f32.gmra.mxu0 %v262
      %v382 = vpop.f32.mrf.mxu0
      %v383 = vadd.f32 0.0, %v382
      %384 = vmatmul.f32.gmra.mxu0 %v263
      %v385 = vpop.f32.mrf.mxu0
      %v386 = vadd.f32 0.0, %v385
      %387 = vmatmul.f32.gmra.mxu0 %v264
      %v388 = vpop.f32.mrf.mxu0
      %v389 = vadd.f32 0.0, %v388
      %390 = vdwg.mxu0
      %vm394 = vcmask 1046528
      %v395 = vrot.slane %v357, 1
      %v396 = vrot.slane %v360, 1
      %v397 = vsel %vm394, %v395, %v396
      %v398 = vrot.slane %v363, 1
      %v399 = vsel %vm394, %v396, %v398
      %v403 = vadd.f32 %v331, %v397
      %v404 = vadd.f32 %v334, %v399
      %v405 = vadd.f32 %v337, %v398
      %vm409 = vcmask 1045504
      %v410 = vrot.slane %v383, 2
      %v411 = vrot.slane %v386, 2
      %v412 = vsel %vm409, %v410, %v411
      %v413 = vrot.slane %v389, 2
      %v414 = vsel %vm409, %v411, %v413
      %v418 = vadd.f32 %v403, %v412
      %v419 = vadd.f32 %v404, %v414
      %v420 = vadd.f32 %v405, %v413
      %v421 = vld [vmem:[%s3] sm:$0x1]
      %v423 = vperm.slane %v421, 0
      %v425 = vadd.f32 %v418, %v423
      %v426 = vadd.f32 %v419, %v423
      %v427 = vadd.f32 %v420, %v423
      %v428 = vmax.f32 %v425, 0.0
      %v429 = vmax.f32 %v426, 0.0
      %v430 = vmax.f32 %v427, 0.0
      %v431 = vlaneseq
      %v432 = vshrl.u32 %v431, 7
      %v433 = vadd.s32 %v432, 8
      %v434 = vadd.s32 %v432, 16
      %vm435 = vcmp.lt.s32.totalorder %v432, 0
      %v436 = vsub.s32 0, %v432
      %v437 = vsel %vm435, %v436, %v432
      %v438 = vand.u32 %v437, 65535
      %v439 = vshrl.u32 %v437, 16
      %v441 = vmul.u32 %v438, 43691
      %v442 = vmul.u32 %v438, 43690
      %v443 = vmul.u32 %v439, 43691
      %v444 = vmul.u32 %v439, 43690
      %v445 = vshll.u32 %v442, 16
      %v446 = vshrl.u32 %v442, 16
      %v447 = vshll.u32 %v443, 16
      %v448 = vshrl.u32 %v443, 16
      %vm449 = vc.u32 %v441, %v445
      %v450 = vsel %vm449, 1, 0
      %v451 = vadd.s32 %v441, %v445
      %v452 = vadd.s32 %v444, %v450
      %vm453 = vc.u32 %v451, %v447
      %v454 = vsel %vm453, 1, 0
      %v455 = vadd.s32 %v451, %v447
      %v456 = vadd.s32 %v452, %v454
      %v457 = vadd.s32 %v456, %v446
      %v458 = vadd.s32 %v457, %v448
      %v459 = vshrl.u32 %v458, 4
      %v460 = vmul.u32 %v459, 24
      %v461 = vsub.s32 %v437, %v460
      %v462 = vsub.s32 0, %v461
      %v463 = vsel %vm435, %v462, %v461
      %vm464 = vcmp.lt.s32.totalorder %v433, 0
      %v465 = vsub.s32 0, %v433
      %v466 = vsel %vm464, %v465, %v433
      %v467 = vand.u32 %v466, 65535
      %v468 = vshrl.u32 %v466, 16
      %v470 = vmul.u32 %v467, 43691
      %v471 = vmul.u32 %v467, 43690
      %v472 = vmul.u32 %v468, 43691
      %v473 = vmul.u32 %v468, 43690
      %v474 = vshll.u32 %v471, 16
      %v475 = vshrl.u32 %v471, 16
      %v476 = vshll.u32 %v472, 16
      %v477 = vshrl.u32 %v472, 16
      %vm478 = vc.u32 %v470, %v474
      %v479 = vsel %vm478, 1, 0
      %v480 = vadd.s32 %v470, %v474
      %v481 = vadd.s32 %v473, %v479
      %vm482 = vc.u32 %v480, %v476
      %v483 = vsel %vm482, 1, 0
      %v484 = vadd.s32 %v480, %v476
      %v485 = vadd.s32 %v481, %v483
      %v486 = vadd.s32 %v485, %v475
      %v487 = vadd.s32 %v486, %v477
      %v488 = vshrl.u32 %v487, 4
      %v489 = vmul.u32 %v488, 24
      %v490 = vsub.s32 %v466, %v489
      %v491 = vsub.s32 0, %v490
      %v492 = vsel %vm464, %v491, %v490
      %vm493 = vcmp.lt.s32.totalorder %v434, 0
      %v494 = vsub.s32 0, %v434
      %v495 = vsel %vm493, %v494, %v434
      %v496 = vand.u32 %v495, 65535
      %v497 = vshrl.u32 %v495, 16
      %v499 = vmul.u32 %v496, 43691
      %v500 = vmul.u32 %v496, 43690
      %v501 = vmul.u32 %v497, 43691
      %v502 = vmul.u32 %v497, 43690
      %v503 = vshll.u32 %v500, 16
      %v504 = vshrl.u32 %v500, 16
      %v505 = vshll.u32 %v501, 16
      %v506 = vshrl.u32 %v501, 16
      %vm507 = vc.u32 %v499, %v503
      %v508 = vsel %vm507, 1, 0
      %v509 = vadd.s32 %v499, %v503
      %v510 = vadd.s32 %v502, %v508
      %vm511 = vc.u32 %v509, %v505
      %v512 = vsel %vm511, 1, 0
      %v513 = vadd.s32 %v509, %v505
      %v514 = vadd.s32 %v510, %v512
      %v515 = vadd.s32 %v514, %v504
      %v516 = vadd.s32 %v515, %v506
      %v517 = vshrl.u32 %v516, 4
      %v518 = vmul.u32 %v517, 24
      %v519 = vsub.s32 %v495, %v518
      %v520 = vsub.s32 0, %v519
      %v521 = vsel %vm493, %v520, %v519
      %vm522 = vcmp.ne.s32.totalorder %v463, 0
      %vm523 = vcmp.ne.s32.totalorder %v492, 0
      %vm524 = vcmp.ne.s32.totalorder %v521, 0
      %vm525 = vcmp.lt.s32.totalorder %v463, 0
      %vm526 = vcmp.lt.s32.totalorder %v492, 0
      %vm527 = vcmp.lt.s32.totalorder %v521, 0
      %vm528 = vmand %vm525, %vm522
      %vm529 = vmand %vm526, %vm523
      %vm530 = vmand %vm527, %vm524
      %v531 = vadd.s32 %v463, 24
      %v532 = vadd.s32 %v492, 24
      %v533 = vadd.s32 %v521, 24
      %v534 = vsel %vm528, %v531, %v463
      %v535 = vsel %vm529, %v532, %v492
      %v536 = vsel %vm530, %v533, %v521
      %p537 = scmp.eq.s32.totalorder %s21, 0
      %vm538 = vcmp.eq.s32.totalorder %v534, 0
      %vm539 = vcmp.eq.s32.totalorder %v535, 0
      %vm540 = vcmp.eq.s32.totalorder %v536, 0
      %s541 = scalar_select %p537, 1, 0
      %v542 = vstv %s541
      %vm543 = vcmp.eq.s32.totalorder %v542, 1
      %vm544 = vmand %vm543, %vm538
      %vm545 = vmand %vm543, %vm539
      %vm546 = vmand %vm543, %vm540
      %vm547 = vcmp.eq.s32.totalorder %v534, 17
      %vm548 = vcmp.eq.s32.totalorder %v535, 17
      %vm549 = vcmp.eq.s32.totalorder %v536, 17
      %vm550 = vmand %vm543, %vm547
      %vm551 = vmand %vm543, %vm548
      %vm552 = vmand %vm543, %vm549
      %vm553 = vmor %vm544, %vm550
      %vm554 = vmor %vm545, %vm551
      %vm555 = vmor %vm546, %vm552
      %v556 = vsel %vm553, 1, 0
      %v557 = vsel %vm554, 1, 0
      %v558 = vsel %vm555, 1, 0
      %vm559 = vcmp.eq.s32.totalorder %v556, 1
      %vm560 = vcmp.eq.s32.totalorder %v557, 1
      %vm561 = vcmp.eq.s32.totalorder %v558, 1
      %v562 = vsel %vm559, 0.0, %v428
      %v563 = vsel %vm560, 0.0, %v429
      %v564 = vsel %vm561, 0.0, %v430
      %v565 = vld [vmem:[%s2] sm:$0xff]
      %v566 = vld [vmem:[%s2 + $0x8] sm:$0xff]
      %v567 = vld [vmem:[%s2 + $0x10] sm:$0xff]
      %v568 = vld [vmem:[%s2 + $0x18] sm:$0xff]
      %v569 = vld [vmem:[%s2 + $0x20] sm:$0xff]
      %v570 = vld [vmem:[%s2 + $0x28] sm:$0xff]
      %v571 = vld [vmem:[%s2 + $0x30] sm:$0xff]
      %v572 = vld [vmem:[%s2 + $0x38] sm:$0xff]
      %v573 = vld [vmem:[%s2 + $0x40] sm:$0xff]
      %v574 = vld [vmem:[%s2 + $0x48] sm:$0xff]
      %v575 = vld [vmem:[%s2 + $0x50] sm:$0xff]
      %v576 = vld [vmem:[%s2 + $0x58] sm:$0xff]
      %v577 = vld [vmem:[%s2 + $0x60] sm:$0xff]
      %v578 = vld [vmem:[%s2 + $0x68] sm:$0xff]
      %v579 = vld [vmem:[%s2 + $0x70] sm:$0xff]
      %v580 = vld [vmem:[%s2 + $0x78] sm:$0xff]
      %v581 = vld [vmem:[%s2 + $0x80] sm:$0xff]
      %v582 = vld [vmem:[%s2 + $0x88] sm:$0xff]
      %v583 = vld [vmem:[%s2 + $0x90] sm:$0xff]
      %v584 = vld [vmem:[%s2 + $0x98] sm:$0xff]
      %v585 = vld [vmem:[%s2 + $0xa0] sm:$0xff]
      %v586 = vld [vmem:[%s2 + $0xa8] sm:$0xff]
      %v587 = vld [vmem:[%s2 + $0xb0] sm:$0xff]
      %v588 = vld [vmem:[%s2 + $0xb8] sm:$0xff]
      %v589 = vld [vmem:[%s2 + $0xc0] sm:$0xff]
      %v590 = vld [vmem:[%s2 + $0xc8] sm:$0xff]
      %v591 = vld [vmem:[%s2 + $0xd0] sm:$0xff]
      %v592 = vld [vmem:[%s2 + $0xd8] sm:$0xff]
      %v593 = vld [vmem:[%s2 + $0xe0] sm:$0xff]
      %v594 = vld [vmem:[%s2 + $0xe8] sm:$0xff]
      %v595 = vld [vmem:[%s2 + $0xf0] sm:$0xff]
      %v596 = vld [vmem:[%s2 + $0xf8] sm:$0xff]
      %v597 = vld [vmem:[%s2 + $0x100] sm:$0xff]
      %v598 = vld [vmem:[%s2 + $0x108] sm:$0xff]
      %v599 = vld [vmem:[%s2 + $0x110] sm:$0xff]
      %v600 = vld [vmem:[%s2 + $0x118] sm:$0xff]
      %v601 = vld [vmem:[%s2 + $0x120] sm:$0xff]
      %v602 = vld [vmem:[%s2 + $0x128] sm:$0xff]
      %v603 = vld [vmem:[%s2 + $0x130] sm:$0xff]
      %v604 = vld [vmem:[%s2 + $0x138] sm:$0xff]
      %v605 = vld [vmem:[%s2 + $0x140] sm:$0xff]
      %v606 = vld [vmem:[%s2 + $0x148] sm:$0xff]
      %v607 = vld [vmem:[%s2 + $0x150] sm:$0xff]
      %v608 = vld [vmem:[%s2 + $0x158] sm:$0xff]
      %v609 = vld [vmem:[%s2 + $0x160] sm:$0xff]
      %v610 = vld [vmem:[%s2 + $0x168] sm:$0xff]
      %v611 = vld [vmem:[%s2 + $0x170] sm:$0xff]
      %v612 = vld [vmem:[%s2 + $0x178] sm:$0xff]
      %613 = vmatpush.msra.mxu0 %v610
      %614 = vmatpush.msra.mxu0 %v607
      %615 = vmatpush.msra.mxu0 %v604
      %616 = vmatpush.msra.mxu0 %v601
      %617 = vmatpush.msra.mxu0 %v598
      %618 = vmatpush.msra.mxu0 %v595
      %619 = vmatpush.msra.mxu0 %v592
      %620 = vmatpush.msra.mxu0 %v589
      %621 = vmatpush.msra.mxu0 %v586
      %622 = vmatpush.msra.mxu0 %v583
      %623 = vmatpush.msra.mxu0 %v580
      %624 = vmatpush.msra.mxu0 %v577
      %625 = vmatpush.msra.mxu0 %v574
      %626 = vmatpush.msra.mxu0 %v571
      %627 = vmatpush.msra.mxu0 %v568
      %628 = vmatpush.msra.mxu0 %v565
      %629 = vmatmul.f32.gmra.mxu0 %v562
      %v630 = vpop.f32.mrf.mxu0
      %v631 = vadd.f32 0.0, %v630
      %632 = vmatmul.f32.gmra.mxu0 %v563
      %v633 = vpop.f32.mrf.mxu0
      %v634 = vadd.f32 0.0, %v633
      %635 = vmatmul.f32.gmra.mxu0 %v564
      %v636 = vpop.f32.mrf.mxu0
      %637 = vdwg.mxu0
      %638 = vmatpush.msra.mxu0 %v611
      %639 = vmatpush.msra.mxu0 %v608
      %640 = vmatpush.msra.mxu0 %v605
      %641 = vmatpush.msra.mxu0 %v602
      %642 = vmatpush.msra.mxu0 %v599
      %643 = vmatpush.msra.mxu0 %v596
      %644 = vmatpush.msra.mxu0 %v593
      %645 = vmatpush.msra.mxu0 %v590
      %646 = vmatpush.msra.mxu0 %v587
      %647 = vmatpush.msra.mxu0 %v584
      %648 = vmatpush.msra.mxu0 %v581
      %649 = vmatpush.msra.mxu0 %v578
      %650 = vmatpush.msra.mxu0 %v575
      %651 = vmatpush.msra.mxu0 %v572
      %652 = vmatpush.msra.mxu0 %v569
      %653 = vmatpush.msra.mxu0 %v566
      %654 = vmatmul.f32.gmra.mxu0 %v562
      %v655 = vpop.f32.mrf.mxu0
      %v656 = vadd.f32 0.0, %v655
      %657 = vmatmul.f32.gmra.mxu0 %v563
      %v658 = vpop.f32.mrf.mxu0
      %v659 = vadd.f32 0.0, %v658
      %660 = vmatmul.f32.gmra.mxu0 %v564
      %v661 = vpop.f32.mrf.mxu0
      %v662 = vadd.f32 0.0, %v661
      %663 = vdwg.mxu0
      %664 = vmatpush.msra.mxu0 %v612
      %665 = vmatpush.msra.mxu0 %v609
      %666 = vmatpush.msra.mxu0 %v606
      %667 = vmatpush.msra.mxu0 %v603
      %668 = vmatpush.msra.mxu0 %v600
      %669 = vmatpush.msra.mxu0 %v597
      %670 = vmatpush.msra.mxu0 %v594
      %671 = vmatpush.msra.mxu0 %v591
      %672 = vmatpush.msra.mxu0 %v588
      %673 = vmatpush.msra.mxu0 %v585
      %674 = vmatpush.msra.mxu0 %v582
      %675 = vmatpush.msra.mxu0 %v579
      %676 = vmatpush.msra.mxu0 %v576
      %677 = vmatpush.msra.mxu0 %v573
      %678 = vmatpush.msra.mxu0 %v570
      %679 = vmatpush.msra.mxu0 %v567
      %680 = vmatmul.f32.gmra.mxu0 %v562
      %v681 = vpop.f32.mrf.mxu0
      %v682 = vadd.f32 0.0, %v681
      %683 = vmatmul.f32.gmra.mxu0 %v563
      %v684 = vpop.f32.mrf.mxu0
      %v685 = vadd.f32 0.0, %v684
      %686 = vmatmul.f32.gmra.mxu0 %v564
      %v687 = vpop.f32.mrf.mxu0
      %v688 = vadd.f32 0.0, %v687
      %689 = vdwg.mxu0
      %v693 = vrot.slane %v656, 1
      %v694 = vrot.slane %v659, 1
      %v695 = vsel %vm394, %v693, %v694
      %v696 = vrot.slane %v662, 1
      %v697 = vsel %vm394, %v694, %v696
      %v700 = vadd.f32 %v631, %v695
      %v701 = vadd.f32 %v634, %v697
      %v705 = vrot.slane %v682, 2
      %v706 = vrot.slane %v685, 2
      %v707 = vsel %vm409, %v705, %v706
      %v708 = vrot.slane %v688, 2
      %v709 = vsel %vm409, %v706, %v708
      %v712 = vadd.f32 %v700, %v707
      %v713 = vadd.f32 %v701, %v709
      %v714 = vld [vmem:[%s4] sm:$0x1]
      %v716 = vperm.slane %v714, 0
      %v718 = vadd.f32 %v712, %v716
      %v719 = vadd.f32 %v713, %v716
      %v723 = vrot.slane %v262, 2
      %v724 = vrot.slane %v263, 2
      %v725 = vsel %vm409, %v723, %v724
      %v726 = vrot.slane %v264, 2
      %v727 = vsel %vm409, %v724, %v726
      %v730 = vadd.f32 %v718, %v725
      %v731 = vadd.f32 %v719, %v727
      %v732 = vmax.f32 %v730, 0.0
      %v733 = vmax.f32 %v731, 0.0
      %734 = vst [vmem:[%s260] sm:$0xff] %v732
      %735 = vst [vmem:[%s260 + $0x8] sm:$0xff] %v733
      %s736 = smul.u32 2, %s21
      %p737 = scmp.lt.s32.totalorder %s20, 1
      %s738 = scalar_select %p737, %s20, 1
      %p739 = scmp.lt.s32.totalorder %s736, 1
      %s740 = scalar_select %p739, %s736, 1
      %s741 = smul.addr %s738, 2
      %s742 = sadd.s32 %s740, %s741
      %s743 = smul.addr %s742, 8
      %s744 = scalar_lea.vmem %s5, %s743
      // Predicated region
      $region41: #{basic_block_forward.1} parent=39 // pred_check
        %p745 = pneg %p160
      $region42: #{basic_block_forward.1} parent=39 // pred_check_branch
        %747 = sbr.rel (%p745) target = $region44
      $region43: #{basic_block_forward.1} parent=39 // pred_region
        %s748 = smul.u32 2, %s21
      $region44: #{basic_block_forward.1} parent=39 // pred_fallthru
        _
    $region40: #{basic_block_forward.1} parent=5 // pred_fallthru
      _
    %p749 = scmp.le.s32.totalorder 2, %s11
    // Predicated region
    $region45: #{basic_block_forward.1} parent=5 // pred_check
      %p750 = pneg %p749
    $region46: #{basic_block_forward.1} parent=5 // pred_check_branch
      %752 = sbr.rel (%p750) target = $region48
    $region47: #{basic_block_forward.1} parent=5 // pred_region
      %s753 = ssub.s32 %s11, 2
      // Predicated region
      $region49: #{basic_block_forward.1} parent=47 // pred_check
        %p754 = pneg %p166
      $region50: #{basic_block_forward.1} parent=47 // pred_check_branch
        %756 = sbr.rel (%p754) target = $region52
      $region51: #{basic_block_forward.1} parent=47 // pred_region
        %s757 = smul.u32 2, %s23
        %p758 = scmp.lt.s32.totalorder %s22, 1
        %s759 = scalar_select %p758, %s22, 1
        %p760 = scmp.lt.s32.totalorder %s757, 1
        %s761 = scalar_select %p760, %s757, 1
        %s762 = smul.addr %s759, 2
        %s763 = sadd.s32 %s761, %s762
        %s764 = smul.addr %s763, 8
        %s765 = scalar_lea.vmem %s5, %s764
      $region52: #{basic_block_forward.1} parent=47 // pred_fallthru
        _
    $region48: #{basic_block_forward.1} parent=5 // pred_fallthru
      _
  $region6: #{basic_block_forward.1} parent=0 // loop_footer
    %s15 = sadd.s32 1, %s11
  $region7: #{basic_block_forward.1} parent=0 // loop_footer_branch
    %10 = sbr.rel target = $region3
  $region8: #{basic_block_forward.1} parent=0 // loop_exit
    _

</llo_original>
